<compile_context>
chip_gen: v6e
topology: v6e:2x2x1
jax: 0.10.0
libtpu: 0.0.40
codegen_flags: <defaults>
</compile_context>

<pallas_src>
import functools
import math

import jax
import jax.numpy as jnp
from jax.experimental import pallas as pl
from jax.experimental.pallas import tpu as pltpu


# ----------------------------------------------------------------------------
# helpers
# ----------------------------------------------------------------------------
@functools.lru_cache(maxsize=None)
def _vmem_limit_bytes():
    """~3/4 of physical VMEM (96 MiB on v5e/v6e, 48 MiB on v7x); safe fallback."""
    try:
        cap = pltpu.get_tpu_info().vmem_capacity_bytes
    except Exception:
        cap = 64 * 1024 * 1024
    return int(min((3 * cap) // 4, 112 * 1024 * 1024))


def _pick_tile(dim, pref, align):
    """Largest multiple of `align` that divides `dim` and is <= `pref`.
    Falls back to the full extent (always legal) when dim % align != 0."""
    if dim % align != 0:
        return dim
    t = min(pref, dim)
    t -= t % align
    while t >= align:
        if dim % t == 0:
            return t
        t -= align
    return dim


def _pick_col_group(slots, d):
    """Head-slots per projection column tile: lane-dense (g*d % 128 == 0),
    aiming for <= 512 lanes; falls back to all slots (full width is legal)."""
    best = None
    for g in range(1, slots + 1):
        if slots % g:
            continue
        if (g * d) % 128:
            continue
        if g * d <= 512:
            best = g                    # largest lane-dense group <= 512 wide
        elif best is None:
            best = g                    # smallest lane-dense group otherwise
            break
    return best if best is not None else slots


def _pick_attn_group(num_heads, n, tq, d, itemsize, budget_bytes):
    """Heads per attention grid step so the f32 score tile + double-buffered
    K/V/Q tiles stay inside a VMEM budget."""
    divisors = [g for g in range(1, num_heads + 1) if num_heads % g == 0]
    for g in reversed(divisors):
        score = g * tq * n * 4
        kv = 2 * 2 * g * n * d * itemsize
        q = 2 * g * tq * d * itemsize
        if score + kv + q <= budget_bytes:
            return g
    return 1


# ----------------------------------------------------------------------------
# Kernel 1: projection  x (M,K) @ Wt (K, S*d) + b  ->  (S, M, d)  (per-head)
# ----------------------------------------------------------------------------
def _proj_kernel(x_ref, wt_ref, b_ref, o_ref, acc_ref, *, gcols, d):
    k = pl.program_id(2)

    @pl.when(k == 0)
    def _():
        acc_ref[...] = jnp.zeros_like(acc_ref)

    # Inputs arrive already in the compute dtype (no in-kernel casts).
    acc_ref[...] += jnp.dot(x_ref[...], wt_ref[...],
                            preferred_element_type=jnp.float32)

    @pl.when(k == pl.num_programs(2) - 1)
    def _():
        res = acc_ref[...] + b_ref[...]            # (tm, gcols*d) f32
        for hh in range(gcols):                    # per-head epilogue store
            o_ref[hh] = res[:, hh * d:(hh + 1) * d].astype(o_ref.dtype)


def pallas_proj_heads(x, wt, b, *, d, out_dtype, tm=256, tk=512):
    """x: (M, K); wt: (K, S*d) pre-transposed weight; b: (S*d,) f32 bias.
    Returns (S, M, d) in `out_dtype` with head/slot s at [s, :, :]."""
    m, kdim = x.shape
    width = wt.shape[1]
    slots = width // d
    gcols = _pick_col_group(slots, d)
    tn = gcols * d
    tm = _pick_tile(m, tm, 8)
    tk = _pick_tile(kdim, tk, 128)
    b2 = b.reshape(1, width).astype(jnp.float32)

    kern = functools.partial(_proj_kernel, gcols=gcols, d=d)
    return pl.pallas_call(
        kern,
        out_shape=jax.ShapeDtypeStruct((slots, m, d), out_dtype),
        grid_spec=pltpu.PrefetchScalarGridSpec(
            num_scalar_prefetch=0,
            grid=(m // tm, slots // gcols, kdim // tk),
            in_specs=[
                pl.BlockSpec((tm, tk), lambda i, j, k: (i, k)),
                pl.BlockSpec((tk, tn), lambda i, j, k: (k, j)),
                pl.BlockSpec((1, tn), lambda i, j, k: (0, j)),
            ],
            out_specs=pl.BlockSpec((gcols, tm, d), lambda i, j, k: (j, i, 0)),
            scratch_shapes=[pltpu.VMEM((tm, tn), jnp.float32)],
        ),
        compiler_params=pltpu.CompilerParams(
            dimension_semantics=("parallel", "parallel", "arbitrary"),
            vmem_limit_bytes=_vmem_limit_bytes()),
    )(x, wt, b2)


# ----------------------------------------------------------------------------
# Kernel 2: attention over a head group, query-row tiled, (H, N, d) layout
# ----------------------------------------------------------------------------
def _attn_kernel(*refs, has_bias):
    if has_bias:
        q_ref, k_ref, v_ref, bias_ref, o_ref = refs
    else:
        q_ref, k_ref, v_ref, o_ref = refs

    q = q_ref[...]                                   # (g, tq, d) compute dtype
    k = k_ref[...]                                   # (g, n,  d)
    v = v_ref[...]                                   # (g, n,  d)

    # 1/sqrt(d_k) is folded into W_q / b_q, so no q*scale here.
    s = jnp.einsum('gqd,gkd->gqk', q, k,
                   preferred_element_type=jnp.float32)      # (g, tq, n) f32
    if has_bias:
        s = s * bias_ref[...][None, :, :]            # torch.mul(x, attn_bias)
    s = s - jnp.max(s, axis=-1, keepdims=True)       # softmax(dim=-1)
    p = jnp.exp(s)
    p = p * pl.reciprocal(jnp.sum(p, axis=-1, keepdims=True), approx=True)
    # TODO(synk): attention dropout is eval-mode identity here.
    o = jnp.einsum('gqk,gkd->gqd', p.astype(v.dtype), v,
                   preferred_element_type=jnp.float32)      # (g, tq, d) f32
    o_ref[...] = o.astype(o_ref.dtype)


def pallas_multihead_attention(q3, k3, v3, attn_bias, *, num_heads, att_size,
                               k_head_offset=0, v_head_offset=0,
                               out_dtype=None):
    """q3/k3/v3: (S, N, d) arrays (possibly the same fused (3H, N, d) slab,
    addressed via head offsets). attn_bias: (N, N) f32 or None.
    Returns (H, N, d)."""
    n = q3.shape[1]
    d = att_size
    out_dtype = out_dtype if out_dtype is not None else q3.dtype
    itemsize = jnp.dtype(q3.dtype).itemsize

    tq = _pick_tile(n, 256, 8)
    g = _pick_attn_group(num_heads, n, tq, d, itemsize,
                         _vmem_limit_bytes() // 2)
    ngroups = num_heads // g
    kb = k_head_offset // g
    vb = v_head_offset // g
    has_bias = attn_bias is not None

    in_specs = [
        pl.BlockSpec((g, tq, d), lambda hi, qi: (hi, qi, 0)),
        pl.BlockSpec((g, n, d), lambda hi, qi: (hi + kb, 0, 0)),
        pl.BlockSpec((g, n, d), lambda hi, qi: (hi + vb, 0, 0)),
    ]
    args = [q3, k3, v3]
    if has_bias:
        in_specs.append(pl.BlockSpec((tq, n), lambda hi, qi: (qi, 0)))
        args.append(attn_bias)

    kern = functools.partial(_attn_kernel, has_bias=has_bias)
    return pl.pallas_call(
        kern,
        out_shape=jax.ShapeDtypeStruct((num_heads, n, d), out_dtype),
        grid_spec=pltpu.PrefetchScalarGridSpec(
            num_scalar_prefetch=0,
            grid=(ngroups, n // tq),
            in_specs=in_specs,
            out_specs=pl.BlockSpec((g, tq, d), lambda hi, qi: (hi, qi, 0)),
        ),
        compiler_params=pltpu.CompilerParams(
            dimension_semantics=("parallel", "parallel"),
            vmem_limit_bytes=_vmem_limit_bytes()),
    )(*args)


# ----------------------------------------------------------------------------
# Kernel 3: output projection  (H, N, d) @ Wo3 (H, d, F) + bo  ->  (N, F)
# (head axis is the K-reduction grid axis: consumes the per-head layout
#  directly, so no transpose back to (N, H*d) is ever materialized)
# ----------------------------------------------------------------------------
def _outproj_kernel(x_ref, w_ref, b_ref, o_ref, acc_ref):
    h = pl.program_id(2)

    @pl.when(h == 0)
    def _():
        acc_ref[...] = jnp.zeros_like(acc_ref)

    acc_ref[...] += jnp.dot(x_ref[0], w_ref[0],
                            preferred_element_type=jnp.float32)

    @pl.when(h == pl.num_programs(2) - 1)
    def _():
        o_ref[...] = (acc_ref[...] + b_ref[...]).astype(o_ref.dtype)


def pallas_outproj(x3, w3, b, *, out_dtype, tm=256, tn=256):
    """x3: (H, N, d); w3: (H, d, F); b: (F,). Returns (N, F)."""
    h, n, d = x3.shape
    fout = w3.shape[2]
    tm = _pick_tile(n, tm, 8)
    tn = _pick_tile(fout, tn, 128)
    b2 = b.reshape(1, fout).astype(jnp.float32)

    return pl.pallas_call(
        _outproj_kernel,
        out_shape=jax.ShapeDtypeStruct((n, fout), out_dtype),
        grid_spec=pltpu.PrefetchScalarGridSpec(
            num_scalar_prefetch=0,
            grid=(n // tm, fout // tn, h),
            in_specs=[
                pl.BlockSpec((1, tm, d), lambda i, j, hh: (hh, i, 0)),
                pl.BlockSpec((1, d, tn), lambda i, j, hh: (hh, 0, j)),
                pl.BlockSpec((1, tn), lambda i, j, hh: (0, j)),
            ],
            out_specs=pl.BlockSpec((tm, tn), lambda i, j, hh: (i, j)),
            scratch_shapes=[pltpu.VMEM((tm, tn), jnp.float32)],
        ),
        compiler_params=pltpu.CompilerParams(
            dimension_semantics=("parallel", "parallel", "arbitrary"),
            vmem_limit_bytes=_vmem_limit_bytes()),
    )(x3, w3, b2)


# ----------------------------------------------------------------------------
# Module wrapper
# ----------------------------------------------------------------------------
class MultiHeadAttentionPallas:
    def __init__(self, input_size, attention_dropout_rate, num_heads, key,
                 compute_dtype=jnp.bfloat16):
        # compute_dtype=jnp.bfloat16 by default (MXU peak on v6e/v7x); all
        # accumulation stays f32 inside the kernels.
        self.num_heads = num_heads
        self.att_size = att_size = input_size // num_heads
        self.scale = float(att_size) ** (-0.5)
        self.compute_dtype = compute_dtype
        # TODO(synk): attention_dropout_rate kept for signature parity only;
        #             dropout is eval-mode identity.
        del attention_dropout_rate

        ks = jax.random.split(key, 8)

        def init_linear(kw, kb, out_f, in_f):
            bound = 1.0 / math.sqrt(in_f)
            w = jax.random.uniform(kw, (out_f, in_f), jnp.float32, -bound, bound)
            b = jax.random.uniform(kb, (out_f,), jnp.float32, -bound, bound)
            return w, b

        hd = num_heads * att_size
        self.Wq, self.bq = init_linear(ks[0], ks[1], hd, input_size)
        self.Wk, self.bk = init_linear(ks[2], ks[3], hd, input_size)
        self.Wv, self.bv = init_linear(ks[4], ks[5], hd, input_size)
        self.Wo, self.bo = init_linear(ks[6], ks[7], input_size, hd)

        cd = compute_dtype
        # Pre-transposed, compute-dtype weights (one-time cast; no per-call
        # transposes or in-kernel casts). 1/sqrt(d_k) is folded into W_q / b_q.
        self.Wq_t = (self.Wq * self.scale).T.astype(cd)
        self.Wk_t = self.Wk.T.astype(cd)
        self.Wv_t = self.Wv.T.astype(cd)
        self.bq_s = (self.bq * self.scale).astype(jnp.float32)
        # Fused QKV weight/bias for the self-attention fast path (one HBM pass
        # over the input, one projection kernel launch instead of three).
        self.Wqkv_t = jnp.concatenate([self.Wq_t, self.Wk_t, self.Wv_t], axis=1)
        self.bqkv = jnp.concatenate([self.bq_s, self.bk, self.bv], axis=0)
        # Output weight reshaped per-head: (H, d, input_size).
        self.Wo3 = self.Wo.T.reshape(num_heads, att_size, input_size).astype(cd)

    def __call__(self, input_q, input_k, input_v, attn_bias):
        h, d = self.num_heads, self.att_size
        cd = self.compute_dtype

        fused = (input_q is input_k) and (input_q is input_v)
        if fused:
            qkv = pallas_proj_heads(input_q.astype(cd), self.Wqkv_t, self.bqkv,
                                    d=d, out_dtype=cd)        # (3H, N, d)
            q3 = k3 = v3 = qkv
            k_off, v_off = h, 2 * h
        else:
            q3 = pallas_proj_heads(input_q.astype(cd), self.Wq_t, self.bq_s,
                                   d=d, out_dtype=cd)          # (H, N, d)
            k3 = pallas_proj_heads(input_k.astype(cd), self.Wk_t, self.bk,
                                   d=d, out_dtype=cd)
            v3 = pallas_proj_heads(input_v.astype(cd), self.Wv_t, self.bv,
                                   d=d, out_dtype=cd)
            k_off = v_off = 0

        bias = None
        if attn_bias is not None:
            bias = jnp.asarray(attn_bias, jnp.float32)
            if bias.ndim == 3:
                # TODO(synk): per-head attn_bias is not supported; only a
                #             broadcast (1, N, N) bias is squeezed here.
                bias = bias.reshape(bias.shape[-2], bias.shape[-1])

        x3 = pallas_multihead_attention(
            q3, k3, v3, bias, num_heads=h, att_size=d,
            k_head_offset=k_off, v_head_offset=v_off, out_dtype=cd)

        return pallas_outproj(x3, self.Wo3, self.bo, out_dtype=jnp.float32)


# ----------------------------------------------------------------------------
# Pure-JAX f32 reference (mirrors the PyTorch forward) for the correctness check
# ----------------------------------------------------------------------------
def reference_forward(m, input_q, input_k, input_v, attn_bias):
    n = input_q.shape[0]
    h, d = m.num_heads, m.att_size
    q = (input_q @ m.Wq.T + m.bq).reshape(n, h, d).transpose(1, 0, 2)
    k = (input_k @ m.Wk.T + m.bk).reshape(n, h, d).transpose(1, 0, 2)
    v = (input_v @ m.Wv.T + m.bv).reshape(n, h, d).transpose(1, 0, 2)
    x = jnp.einsum('hnd,hmd->hnm', q * m.scale, k)
    if attn_bias is not None:
        x = x * attn_bias
    x = jax.nn.softmax(x, axis=2)
    x = jnp.einsum('hnm,hmd->hnd', x, v)
    x = x.transpose(1, 0, 2).reshape(n, h * d)
    return x @ m.Wo.T + m.bo


if __name__ == "__main__":
    key = jax.random.PRNGKey(0)
    k_params, k_q, k_k, k_v, k_b = jax.random.split(key, 5)

    N = 8               # tokens (rows of the 2-D inputs)
    INPUT_SIZE = 32
    NUM_HEADS = 4

    mha = MultiHeadAttentionPallas(INPUT_SIZE, attention_dropout_rate=0.0,
                                   num_heads=NUM_HEADS, key=k_params)

    input_q = jax.random.normal(k_q, (N, INPUT_SIZE), jnp.float32)
    input_k = jax.random.normal(k_k, (N, INPUT_SIZE), jnp.float32)
    input_v = jax.random.normal(k_v, (N, INPUT_SIZE), jnp.float32)
    attn_bias = jax.random.uniform(k_b, (N, N), jnp.float32, 0.5, 1.5)

    # Tolerance absorbs bf16 compute (f32 accumulation) + EUP approx reciprocal.
    tol = dict(atol=5e-2, rtol=5e-2)

    # 1) cross-attention (distinct q/k/v inputs) with multiplicative bias
    out = jax.block_until_ready(mha(input_q, input_k, input_v, attn_bias))
    assert out.shape == input_q.shape, (out.shape, input_q.shape)
    ref = reference_forward(mha, input_q, input_k, input_v, attn_bias)
    assert jnp.allclose(out, ref, **tol), float(jnp.max(jnp.abs(out - ref)))

    # 2) self-attention (same tensor) -> exercises the fused QKV projection
    out = jax.block_until_ready(mha(input_q, input_q, input_q, attn_bias))
    ref = reference_forward(mha, input_q, input_q, input_q, attn_bias)
    assert jnp.allclose(out, ref, **tol), float(jnp.max(jnp.abs(out - ref)))

    # 3) attn_bias=None -> exercises the no-bias attention kernel variant
    out = jax.block_until_ready(mha(input_q, input_q, input_q, None))
    ref = reference_forward(mha, input_q, input_q, input_q, None)
    assert jnp.allclose(out, ref, **tol), float(jnp.max(jnp.abs(out - ref)))

    print("KERNEL_OK")
</pallas_src>

<mosaic_0001>
module attributes {stable_mosaic.version = 11 : i64} {
  func.func @_proj_kernel(%arg0: i32, %arg1: i32, %arg2: i32, %arg3: memref<8x32xbf16, #tpu.memory_space<vmem>>, %arg4: memref<32x32xbf16, #tpu.memory_space<vmem>>, %arg5: memref<1x32xf32, #tpu.memory_space<vmem>>, %arg6: memref<4x8x8xbf16, #tpu.memory_space<vmem>>, %arg7: memref<8x32xf32, #tpu.memory_space<vmem>>) attributes {dimension_semantics = [#tpu.dimension_semantics<parallel>, #tpu.dimension_semantics<parallel>, #tpu.dimension_semantics<arbitrary>], iteration_bounds = array<i64: 1, 1, 1>, scalar_prefetch = 0 : i64, scratch_operands = 1 : i64, tpu.core_type = #tpu.core_type<tc>, window_params = [{transform_indices = @transform_0, window_bounds = array<i64: 8, 32>}, {transform_indices = @transform_1, window_bounds = array<i64: 32, 32>}, {transform_indices = @transform_2, window_bounds = array<i64: 1, 32>}, {transform_indices = @transform_3, window_bounds = array<i64: 4, 8, 8>}]} {
    %c0_i32 = arith.constant 0 : i32
    %0 = arith.cmpi eq, %arg2, %c0_i32 : i32
    %1 = arith.extui %0 : i1 to i32
    %c0_i32_0 = arith.constant 0 : i32
    %2 = arith.cmpi ne, %1, %c0_i32_0 : i32
    scf.if %2 {
      %cst_10 = arith.constant 0.000000e+00 : f32
      %12 = vector.broadcast %cst_10 : f32 to vector<8x32xf32>
      %c0_11 = arith.constant 0 : index
      %c0_12 = arith.constant 0 : index
      %13 = vector.load %arg7[%c0_11, %c0_12] : memref<8x32xf32, #tpu.memory_space<vmem>>, vector<8x32xf32>
      tpu.vector_store %arg7[%c0_11, %c0_12], %12 {strides = array<i32>} : memref<8x32xf32, #tpu.memory_space<vmem>>, vector<8x32xf32>,
    } else {
    }
    %c0 = arith.constant 0 : index
    %c0_1 = arith.constant 0 : index
    %3 = vector.load %arg7[%c0, %c0_1] : memref<8x32xf32, #tpu.memory_space<vmem>>, vector<8x32xf32>
    %c0_2 = arith.constant 0 : index
    %c0_3 = arith.constant 0 : index
    %4 = vector.load %arg3[%c0_2, %c0_3] : memref<8x32xbf16, #tpu.memory_space<vmem>>, vector<8x32xbf16>
    %c0_4 = arith.constant 0 : index
    %c0_5 = arith.constant 0 : index
    %5 = vector.load %arg4[%c0_4, %c0_5] : memref<32x32xbf16, #tpu.memory_space<vmem>>, vector<32x32xbf16>
    %cst = arith.constant dense<0.000000e+00> : vector<8x32xf32>
    %6 = tpu.matmul %4, %5, %cst {dimension_numbers = #tpu.dot_dimension_numbers<[1], [0], [0], [1], [0, 0, 1, 1], [], []>} : vector<8x32xbf16>, vector<32x32xbf16>, vector<8x32xf32> -> vector<8x32xf32>
    %7 = arith.addf %3, %6 : vector<8x32xf32>
    %c0_6 = arith.constant 0 : index
    %c0_7 = arith.constant 0 : index
    %8 = vector.load %arg7[%c0_6, %c0_7] : memref<8x32xf32, #tpu.memory_space<vmem>>, vector<8x32xf32>
    tpu.vector_store %arg7[%c0_6, %c0_7], %7 {strides = array<i32>} : memref<8x32xf32, #tpu.memory_space<vmem>>, vector<8x32xf32>,
    %c0_i32_8 = arith.constant 0 : i32
    %9 = arith.cmpi eq, %arg2, %c0_i32_8 : i32
    %10 = arith.extui %9 : i1 to i32
    %c0_i32_9 = arith.constant 0 : i32
    %11 = arith.cmpi ne, %10, %c0_i32_9 : i32
    scf.if %11 {
      %c0_10 = arith.constant 0 : index
      %c0_11 = arith.constant 0 : index
      %12 = vector.load %arg7[%c0_10, %c0_11] : memref<8x32xf32, #tpu.memory_space<vmem>>, vector<8x32xf32>
      %c0_12 = arith.constant 0 : index
      %c0_13 = arith.constant 0 : index
      %13 = vector.load %arg5[%c0_12, %c0_13] : memref<1x32xf32, #tpu.memory_space<vmem>>, vector<1x32xf32>
      %14 = vector.broadcast %13 : vector<1x32xf32> to vector<8x32xf32>
      %15 = arith.addf %12, %14 : vector<8x32xf32>
      %16 = vector.extract_strided_slice %15 {offsets = [0, 0], sizes = [8, 8], strides = [1, 1]} : vector<8x32xf32> to vector<8x8xf32>
      %17 = arith.truncf %16 : vector<8x8xf32> to vector<8x8xbf16>
      %c0_14 = arith.constant 0 : index
      %c0_15 = arith.constant 0 : index
      %c0_16 = arith.constant 0 : index
      %18 = vector.load %arg6[%c0_14, %c0_15, %c0_16] : memref<4x8x8xbf16, #tpu.memory_space<vmem>>, vector<1x8x8xbf16>
      %19 = vector.shape_cast %18 : vector<1x8x8xbf16> to vector<8x8xbf16>
      %20 = vector.shape_cast %17 : vector<8x8xbf16> to vector<1x8x8xbf16>
      tpu.vector_store %arg6[%c0_14, %c0_15, %c0_16], %20 {strides = array<i32>} : memref<4x8x8xbf16, #tpu.memory_space<vmem>>, vector<1x8x8xbf16>,
      %21 = vector.extract_strided_slice %15 {offsets = [0, 8], sizes = [8, 8], strides = [1, 1]} : vector<8x32xf32> to vector<8x8xf32>
      %22 = arith.truncf %21 : vector<8x8xf32> to vector<8x8xbf16>
      %c1 = arith.constant 1 : index
      %c0_17 = arith.constant 0 : index
      %c0_18 = arith.constant 0 : index
      %23 = vector.load %arg6[%c1, %c0_17, %c0_18] : memref<4x8x8xbf16, #tpu.memory_space<vmem>>, vector<1x8x8xbf16>
      %24 = vector.shape_cast %23 : vector<1x8x8xbf16> to vector<8x8xbf16>
      %25 = vector.shape_cast %22 : vector<8x8xbf16> to vector<1x8x8xbf16>
      tpu.vector_store %arg6[%c1, %c0_17, %c0_18], %25 {strides = array<i32>} : memref<4x8x8xbf16, #tpu.memory_space<vmem>>, vector<1x8x8xbf16>,
      %26 = vector.extract_strided_slice %15 {offsets = [0, 16], sizes = [8, 8], strides = [1, 1]} : vector<8x32xf32> to vector<8x8xf32>
      %27 = arith.truncf %26 : vector<8x8xf32> to vector<8x8xbf16>
      %c2 = arith.constant 2 : index
      %c0_19 = arith.constant 0 : index
      %c0_20 = arith.constant 0 : index
      %28 = vector.load %arg6[%c2, %c0_19, %c0_20] : memref<4x8x8xbf16, #tpu.memory_space<vmem>>, vector<1x8x8xbf16>
      %29 = vector.shape_cast %28 : vector<1x8x8xbf16> to vector<8x8xbf16>
      %30 = vector.shape_cast %27 : vector<8x8xbf16> to vector<1x8x8xbf16>
      tpu.vector_store %arg6[%c2, %c0_19, %c0_20], %30 {strides = array<i32>} : memref<4x8x8xbf16, #tpu.memory_space<vmem>>, vector<1x8x8xbf16>,
      %31 = vector.extract_strided_slice %15 {offsets = [0, 24], sizes = [8, 8], strides = [1, 1]} : vector<8x32xf32> to vector<8x8xf32>
      %32 = arith.truncf %31 : vector<8x8xf32> to vector<8x8xbf16>
      %c3 = arith.constant 3 : index
      %c0_21 = arith.constant 0 : index
      %c0_22 = arith.constant 0 : index
      %33 = vector.load %arg6[%c3, %c0_21, %c0_22] : memref<4x8x8xbf16, #tpu.memory_space<vmem>>, vector<1x8x8xbf16>
      %34 = vector.shape_cast %33 : vector<1x8x8xbf16> to vector<8x8xbf16>
      %35 = vector.shape_cast %32 : vector<8x8xbf16> to vector<1x8x8xbf16>
      tpu.vector_store %arg6[%c3, %c0_21, %c0_22], %35 {strides = array<i32>} : memref<4x8x8xbf16, #tpu.memory_space<vmem>>, vector<1x8x8xbf16>,
    } else {
    }
    return
  }
  func.func @transform_0(%arg0: i32, %arg1: i32, %arg2: i32) -> (i32, i32) {
    %c0_i32 = arith.constant 0 : i32
    return %arg0, %arg2 : i32, i32
  }
  func.func @transform_1(%arg0: i32, %arg1: i32, %arg2: i32) -> (i32, i32) {
    %c0_i32 = arith.constant 0 : i32
    return %arg2, %arg1 : i32, i32
  }
  func.func @transform_2(%arg0: i32, %arg1: i32, %arg2: i32) -> (i32, i32) {
    %c0_i32 = arith.constant 0 : i32
    %c0_i32_0 = arith.constant 0 : i32
    return %c0_i32, %arg1 : i32, i32
  }
  func.func @transform_3(%arg0: i32, %arg1: i32, %arg2: i32) -> (i32, i32, i32) {
    %c0_i32 = arith.constant 0 : i32
    %c0_i32_0 = arith.constant 0 : i32
    return %arg1, %arg0, %c0_i32 : i32, i32, i32
  }
}

</mosaic_0001>

<llo_original>
// kernel: tpu_custom_call.1
$region0: #{tpu_custom_call.1}
  #allocation0 [shape = 'u32[]', space=smem, size = 0x4, offset = 0x4, fixed_abs, tag = 'smem constant byte address 0x4 - core index']
  #allocation1 [shape = 'u32[144,128]{1,0:T(1,128)}', space=vmem, size = 0x12000, scoped, tag = 'internal scratch']
  #allocation2 [shape = 'f32[8,32]{1,0:T(8,128)}', space=vmem, size = 0x1000, scoped, tag = 'scratch operand']
  %s0 = inlined_call_operand.hbm [shape: bf16[8,32], index: 0, kind: input, shape index: {}]
  %s1 = inlined_call_operand.hbm [shape: bf16[32,32], index: 1, kind: input, shape index: {}]
  %s2 = inlined_call_operand.vmem [shape: f32[1,32], index: 2, kind: input, shape index: {}]
  %s3 = inlined_call_operand.hbm [shape: bf16[4,8,8], index: 3, kind: output, shape index: {}]
  %s4 = sld [smem:[#allocation0]]
  $region38: #{tpu_custom_call.1} parent=0
    _
  %s6 = ssub.s32 1, %s4
  %s7 = scalar_select 0, %s6, %s4
  $region1: #{tpu_custom_call.1} parent=0
    #allocation3 [shape = 'u8[2048]{0}', space=vmem, size = 0x800, scoped, tag = 'input window, operand 0, single buffered']
    #allocation4 [shape = 's32[1]{0}', space=sflag, size = 0x4, scoped, tag = 'scoped memory for tpu_custom_call.1']
    #allocation5 [shape = 's32[1]{0}', space=sflag, size = 0x4, scoped, tag = 'scoped memory for tpu_custom_call.1']
    #allocation6 [shape = 'u8[8192]{0}', space=vmem, size = 0x2000, scoped, tag = 'input window, operand 1, single buffered']
    #allocation7 [shape = 's32[1]{0}', space=sflag, size = 0x4, scoped, tag = 'scoped memory for tpu_custom_call.1']
    #allocation8 [shape = 'u8[8192]{0}', space=vmem, size = 0x2000, scoped, tag = 'output window, operand 0, single buffered']
    %8 = vsyncpa [#allocation4], 0
    %9 = vsyncpa [#allocation7], 0
    %10 = vsyncpa [#allocation5], 0
    // Predicated region
    $region2: #{tpu_custom_call.1} parent=1 // pred_check
      _
    $region3: #{tpu_custom_call.1} parent=1 // pred_check_branch
      %12 = sbr.rel (0) target = $region5
    $region4: #{tpu_custom_call.1} parent=1 // pred_region
      %s14 = ssub.s32 64, 64
      %15 = vsyncadd [#allocation4], %s14
      %s17 = sshll.u32 [#allocation3], 4
      %s18 = int_to_ptr.vmem [resolvable:$true] %s17
      %20 = dma.hbm_to_vmem [thread:$0]  %s0, 64, %s18, [#allocation4]
    $region5: #{tpu_custom_call.1} parent=1 // pred_fallthru
      _
    // Predicated region
    $region6: #{tpu_custom_call.1} parent=1 // pred_check
      _
    $region7: #{tpu_custom_call.1} parent=1 // pred_check_branch
      %22 = sbr.rel (0) target = $region9
    $region8: #{tpu_custom_call.1} parent=1 // pred_region
      %s24 = ssub.s32 256, 256
      %25 = vsyncadd [#allocation7], %s24
      %s26 = sshll.u32 [#allocation6], 4
      %s27 = int_to_ptr.vmem [resolvable:$true] %s26
      %32 = dma.hbm_to_vmem [thread:$0]  %s1, 256, %s27, [#allocation7], 64, 64, 4
    $region9: #{tpu_custom_call.1} parent=1 // pred_fallthru
      _
    // Predicated region
    $region10: #{tpu_custom_call.1} parent=1 // pred_check
      _
    $region11: #{tpu_custom_call.1} parent=1 // pred_check_branch
      %34 = sbr.rel (0) target = $region13
    $region12: #{tpu_custom_call.1} parent=1 // pred_region
      _
    $region13: #{tpu_custom_call.1} parent=1 // pred_fallthru
      _
    // Predicated region
    $region14: #{tpu_custom_call.1} parent=1 // pred_check
      _
    $region15: #{tpu_custom_call.1} parent=1 // pred_check_branch
      %36 = sbr.rel (0) target = $region17
    $region16: #{tpu_custom_call.1} parent=1 // pred_region
      %37 = dma.done [#allocation4], 64
    $region17: #{tpu_custom_call.1} parent=1 // pred_fallthru
      _
    // Predicated region
    $region18: #{tpu_custom_call.1} parent=1 // pred_check
      _
    $region19: #{tpu_custom_call.1} parent=1 // pred_check_branch
      %39 = sbr.rel (0) target = $region21
    $region20: #{tpu_custom_call.1} parent=1 // pred_region
      %40 = dma.done [#allocation7], 256
    $region21: #{tpu_custom_call.1} parent=1 // pred_fallthru
      _
    %p42 = scmp.eq.s32.totalorder 0, 0
    // Predicated region
    $region22: #{tpu_custom_call.1} parent=1 // pred_check
      %p43 = pneg %p42
    $region23: #{tpu_custom_call.1} parent=1 // pred_check_branch
      %45 = sbr.rel (%p43) target = $region25
    $region24: #{tpu_custom_call.1} parent=1 // pred_region
      %vm46 = vcmask 261120
      %47 = vst.msk [vmem:[#allocation2] sm:$0xff] %vm46, 0.0
    $region25: #{tpu_custom_call.1} parent=1 // pred_fallthru
      _
    %v48 = vld [vmem:[#allocation2] sm:$0xff]
    %v49 = vld [vmem:[#allocation3] sm:$0xf]
    %v50 = vld [vmem:[#allocation6] sm:$0xf]
    %v51 = vld [vmem:[#allocation6 + $0x4] sm:$0xf]
    %v52 = vld [vmem:[#allocation6 + $0x8] sm:$0xf]
    %v53 = vld [vmem:[#allocation6 + $0xc] sm:$0xf]
    %v58 = vunpack.c.l.b16 %v50
    %v59 = vunpack.c.l.b16 %v51
    %v60 = vunpack.c.l.b16 %v52
    %v61 = vunpack.c.l.b16 %v53
    %v62 = vpack.c.b16 %v59, %v58
    %v63 = vpack.c.b16 %v61, %v60
    %vm66 = vcmask 261120
    %v68 = vsel %vm66, %v49, 0
    %70 = vmatprep.subr.bf16.mxu0 0
    %71 = vmatpush1.bf16.msra.mxu0 0
    %72 = vmatprep.subr.bf16.mxu0 0
    %73 = vmatpush1.bf16.msra.mxu0 0
    %74 = vmatprep.subr.bf16.mxu0 0
    %75 = vmatpush1.bf16.msra.mxu0 0
    %76 = vmatprep.subr.bf16.mxu0 0
    %77 = vmatpush1.bf16.msra.mxu0 0
    %78 = vmatprep.subr.bf16.mxu0 0
    %79 = vmatpush1.bf16.msra.mxu0 0
    %80 = vmatprep.subr.bf16.mxu0 0
    %81 = vmatpush1.bf16.msra.mxu0 0
    %82 = vmatprep.subr.bf16.mxu0 0
    %83 = vmatpush1.bf16.msra.mxu0 %v63
    %84 = vmatprep.subr.bf16.mxu0 0
    %85 = vmatpush1.bf16.msra.mxu0 %v62
    %86 = vmatprep.subr.bf16.mxu0 0
    %87 = vmatpush2.bf16.msra.mxu0 0
    %88 = vmatprep.subr.bf16.mxu0 0
    %89 = vmatpush2.bf16.msra.mxu0 0
    %90 = vmatprep.subr.bf16.mxu0 0
    %91 = vmatpush2.bf16.msra.mxu0 0
    %92 = vmatprep.subr.bf16.mxu0 0
    %93 = vmatpush2.bf16.msra.mxu0 0
    %94 = vmatprep.subr.bf16.mxu0 0
    %95 = vmatpush2.bf16.msra.mxu0 0
    %96 = vmatprep.subr.bf16.mxu0 0
    %97 = vmatpush2.bf16.msra.mxu0 0
    %98 = vmatprep.subr.bf16.mxu0 0
    %99 = vmatpush2.bf16.msra.mxu0 0
    %100 = vmatprep.subr.bf16.mxu0 0
    %101 = vmatpush2.bf16.msra.mxu0 0
    %102 = vmatprep.mubr.bf16.mxu0 0
    %103 = vmatmul.mubr.bf16.gmra.mxu0 %v68
    %v104 = vpop.f32.mrf.mxu0
    %v105 = vadd.f32 0.0, %v104
    %v106 = vpop.f32.mrf.mxu0
    %v107 = vpop.f32.mrf.mxu0
    %v108 = vpop.f32.mrf.mxu0
    %109 = vdwg.mxu0
    %v110 = vadd.f32 %v48, %v105
    %111 = vst.msk [vmem:[#allocation2] sm:$0xff] %vm66, %v110
    // Predicated region
    $region26: #{tpu_custom_call.1} parent=1 // pred_check
      %p112 = pneg %p42
    $region27: #{tpu_custom_call.1} parent=1 // pred_check_branch
      %114 = sbr.rel (%p112) target = $region29
    $region28: #{tpu_custom_call.1} parent=1 // pred_region
      %v115 = vld [vmem:[#allocation2] sm:$0xff]
      %v116 = vld [vmem:[%s2] sm:$0x1]
      %v118 = vlaneseq
      %v119 = vshrl.u32 %v118, 7
      %v120 = vsub.s32 0, %v119
      %v121 = vrot.slane %v116, %v120
      %v123 = vadd.f32 %v115, %v121
      %v124 = vpack.c.bf16 %v123, %v123
      %vm125 = vcmask 60416
      %126 = vst.msk [vmem:[#allocation8] sm:$0xf] %vm125, %v124
      %v128 = vunpack.c.l.b16 %v124
      %v129 = vpack.c.b16 %v128, %v128
      %130 = vrot.lane.b32.xlu0 %v129, 120
      %v131 = vpop.permute.xlu0 %130
      %s133 = scalar_lea.vmem [#allocation8], 4
      %134 = vst.msk [vmem:[%s133] sm:$0xf] %vm125, %v131
      %135 = vrot.lane.b32.xlu0 %v129, 112
      %v136 = vpop.permute.xlu0 %135
      %s138 = scalar_lea.vmem [#allocation8], 8
      %139 = vst.msk [vmem:[%s138] sm:$0xf] %vm125, %v136
      %140 = vrot.lane.b32.xlu0 %v129, 104
      %v141 = vpop.permute.xlu0 %140
      %s143 = scalar_lea.vmem [#allocation8], 12
      %144 = vst.msk [vmem:[%s143] sm:$0xf] %vm125, %v141
    $region29: #{tpu_custom_call.1} parent=1 // pred_fallthru
      _
    // Predicated region
    $region30: #{tpu_custom_call.1} parent=1 // pred_check
      _
    $region31: #{tpu_custom_call.1} parent=1 // pred_check_branch
      %146 = sbr.rel (0) target = $region33
    $region32: #{tpu_custom_call.1} parent=1 // pred_region
      %s148 = ssub.s32 256, 256
      %149 = vsyncadd [#allocation5], %s148
      %s150 = sshll.u32 [#allocation8], 4
      %s151 = int_to_ptr.vmem [resolvable:$true] %s150
      %156 = dma.vmem_to_hbm [thread:$0]  %s151, 256, %s3, [#allocation5], 64, 64, 4
    $region33: #{tpu_custom_call.1} parent=1 // pred_fallthru
      _
    // Predicated region
    $region34: #{tpu_custom_call.1} parent=1 // pred_check
      _
    $region35: #{tpu_custom_call.1} parent=1 // pred_check_branch
      %158 = sbr.rel (0) target = $region37
    $region36: #{tpu_custom_call.1} parent=1 // pred_region
      %159 = dma.done [#allocation5], 256
    $region37: #{tpu_custom_call.1} parent=1 // pred_fallthru
      _
    %160 = vsyncpa [#allocation4], 1
    %161 = vsyncpa [#allocation7], 1
    %162 = vsyncpa [#allocation5], 1

</llo_original>
